<compile_context>
chip_gen: v7x
topology: tpu7x:2x2x1
jax: 0.10.0
libtpu: 0.0.40
codegen_flags: <defaults>
</compile_context>

<pallas_src>
import jax
import jax.numpy as jnp
from jax.experimental import pallas as pl
from jax.experimental.pallas import tpu as pltpu


# ---------------------------------------------------------------------------
# Kernel
# ---------------------------------------------------------------------------
def _approx_sigmoid(x):
    # 1 / (1 + exp(-x)); exp on the EUP, divide via EUP approx reciprocal.
    return pl.reciprocal(1.0 + jnp.exp(-x), approx=True)


def ncdm_kernel(stu_ref, kdiff_ref, kp_ref,
                w1t_ref, b1_ref, w2t_ref, b2_ref, w3_ref, b3_ref,
                out_ref):
    # Embedding post-processing + interaction term (f32 on the VPU).
    stat_emb = jax.nn.sigmoid(stu_ref[...].astype(jnp.float32))     # (TB, K)
    k_diff   = jax.nn.sigmoid(kdiff_ref[...].astype(jnp.float32))   # (TB, K)
    # sigmoid(e_difficulty) is already folded into kp_ref in the wrapper.
    input_x  = (stat_emb - k_diff) * kp_ref[...].astype(jnp.float32)  # (TB, K)

    # prednet_full1: x @ |W1|^T  — bf16 MXU matmul, f32 accumulation, + sigmoid.
    h1 = _approx_sigmoid(
        jnp.dot(input_x.astype(jnp.bfloat16), w1t_ref[...],
                preferred_element_type=jnp.float32) + b1_ref[...])   # (TB, 512) f32
    # TODO(synk): Dropout(p=0.5) implemented as identity (eval-mode semantics)

    # prednet_full2: bf16 MXU matmul + sigmoid.
    h2 = _approx_sigmoid(
        jnp.dot(h1.astype(jnp.bfloat16), w2t_ref[...],
                preferred_element_type=jnp.float32) + b2_ref[...])   # (TB, 256) f32

    # prednet_full3 (256 -> 1): VPU multiply + lane reduction, then one small
    # XLU relayout (TB,1) -> (1,TB) so the output block is lane-dense.
    logit_col = jnp.sum(h2 * w3_ref[...], axis=-1, keepdims=True)    # (TB, 1)
    logit_row = jnp.transpose(logit_col) + b3_ref[...]               # (1, TB)
    out_ref[...] = _approx_sigmoid(logit_row)[None]                  # (1, 1, TB)


# ---------------------------------------------------------------------------
# Wrapper
# ---------------------------------------------------------------------------
def _round_up(x, m):
    return (x + m - 1) // m * m


def ncdm_forward(params, stu_id, input_exercise, input_knowledge_point):
    """Embedding gathers in plain JAX + a single batch-tiled Pallas call."""
    B = stu_id.shape[0]
    K = params["student_emb"].shape[1]
    L1 = params["w1"].shape[0]   # 512
    L2 = params["w2"].shape[0]   # 256

    # Embedding lookups (gather) — glue in plain JAX.
    stu_emb = jnp.take(params["student_emb"], stu_id, axis=0)           # (B, K)
    k_diff  = jnp.take(params["k_difficulty"], input_exercise, axis=0)  # (B, K)
    e_diff  = jnp.take(params["e_difficulty"], input_exercise, axis=0)  # (B, 1)

    # Fold sigmoid(e_difficulty) into the knowledge-point mask (wrapper side);
    # removes the lane-sparse (TB,1) stream + its in-kernel sigmoid/broadcast.
    kp_eff = jax.nn.sigmoid(e_diff.astype(jnp.float32)) \
        * input_knowledge_point.astype(jnp.float32)                      # (B, K)

    # bf16 streamed activations (halves DMA / per-buffer VMEM).
    stu_emb = stu_emb.astype(jnp.bfloat16)
    k_diff  = k_diff.astype(jnp.bfloat16)
    kp_eff  = kp_eff.astype(jnp.bfloat16)

    # PosLinear weight = 2*relu(-W)+W == |W|; hoisted, pre-transposed, bf16 for MXU.
    w1t = jnp.abs(params["w1"]).T.astype(jnp.bfloat16)    # (K, 512)
    w2t = jnp.abs(params["w2"]).T.astype(jnp.bfloat16)    # (512, 256)
    w3  = jnp.abs(params["w3"]).astype(jnp.float32)       # (1, 256) — VPU multiply, keep f32
    b1  = params["b1"].reshape(1, L1).astype(jnp.float32)
    b2  = params["b2"].reshape(1, L2).astype(jnp.float32)
    b3  = params["b3"].reshape(1, 1).astype(jnp.float32)

    # Batch tiling:
    #  * B <= 128: minimal tile (round to 8 sublanes) so small batches don't run
    #    >90% padded rows through the MXU/EUP.
    #  * B  > 128: at least two tiles so dimension_semantics=("parallel",) can
    #    shard across v7x's two TensorCores, capped at 2048 rows for VMEM headroom.
    if B <= 128:
        TB = _round_up(max(B, 1), 8)
    else:
        TB = min(2048, _round_up(-(-B // 2), 128))
    B_pad = _round_up(B, TB)
    if B_pad != B:
        pad = ((0, B_pad - B), (0, 0))
        stu_emb = jnp.pad(stu_emb, pad)
        k_diff  = jnp.pad(k_diff, pad)
        kp_eff  = jnp.pad(kp_eff, pad)
    n_tiles = B_pad // TB

    tile_spec  = lambda shape: pl.BlockSpec(shape, lambda i: (i, 0))
    const_spec = lambda shape: pl.BlockSpec(shape, lambda i: (0, 0))

    in_specs = [
        tile_spec((TB, K)),    # stu_emb (bf16)
        tile_spec((TB, K)),    # k_diff  (bf16)
        tile_spec((TB, K)),    # kp_eff  (bf16, e_difficulty folded in)
        const_spec((K, L1)),   # w1t (bf16, resident across tiles)
        const_spec((1, L1)),   # b1
        const_spec((L1, L2)),  # w2t (bf16)
        const_spec((1, L2)),   # b2
        const_spec((1, L2)),   # w3 row
        const_spec((1, 1)),    # b3
    ]

    cost = pl.CostEstimate(
        flops=2 * B_pad * (K * L1 + L1 * L2 + L2) + 4 * B_pad * K,
        transcendentals=B_pad * (2 * K + L1 + L2 + 1),
        bytes_accessed=2 * B_pad * 3 * K + 4 * B_pad
                       + 2 * (K * L1 + L1 * L2) + 4 * (L1 + 2 * L2 + 1),
    )

    out = pl.pallas_call(
        ncdm_kernel,
        out_shape=jax.ShapeDtypeStruct((n_tiles, 1, TB), jnp.float32),
        grid=(n_tiles,),
        in_specs=in_specs,
        out_specs=pl.BlockSpec((1, 1, TB), lambda i: (i, 0, 0)),
        compiler_params=pltpu.CompilerParams(
            dimension_semantics=("parallel",),
            vmem_limit_bytes=48 * 1024 * 1024),
        cost_estimate=cost,
    )(stu_emb, k_diff, kp_eff, w1t, b1, w2t, b2, w3, b3)

    # Lane-dense tiles back to a flat (B,) vector (matches output_1.view(-1)).
    return out.reshape(-1)[:B]


# ---------------------------------------------------------------------------
# Deterministic parameter init (xavier_normal_ on every '*weight*' param,
# matching the module's __init__ loop).
# ---------------------------------------------------------------------------
def xavier_normal(key, shape):
    fan_out, fan_in = shape
    std = (2.0 / (fan_in + fan_out)) ** 0.5
    return std * jax.random.normal(key, shape, dtype=jnp.float32)


def init_params(key, knowledge_n, exer_n, student_n):
    prednet_len1, prednet_len2 = 512, 256
    keys = jax.random.split(key, 9)
    params = {
        "student_emb":  xavier_normal(keys[0], (student_n, knowledge_n)),
        "k_difficulty": xavier_normal(keys[1], (exer_n, knowledge_n)),
        "e_difficulty": xavier_normal(keys[2], (exer_n, 1)),
        "w1": xavier_normal(keys[3], (prednet_len1, knowledge_n)),
        "b1": 0.01 * jax.random.normal(keys[4], (prednet_len1,), dtype=jnp.float32),
        "w2": xavier_normal(keys[5], (prednet_len2, prednet_len1)),
        "b2": 0.01 * jax.random.normal(keys[6], (prednet_len2,), dtype=jnp.float32),
        "w3": xavier_normal(keys[7], (1, prednet_len2)),
        "b3": 0.01 * jax.random.normal(keys[8], (1,), dtype=jnp.float32),
    }
    return params


# ---------------------------------------------------------------------------
if __name__ == "__main__":
    knowledge_n, exer_n, student_n = 32, 20, 16
    B = 8

    key = jax.random.PRNGKey(0)
    pkey, k_stu, k_exer, k_kp = jax.random.split(key, 4)

    params = init_params(pkey, knowledge_n, exer_n, student_n)

    stu_id = jax.random.randint(k_stu, (B,), 0, student_n, dtype=jnp.int32)
    input_exercise = jax.random.randint(k_exer, (B,), 0, exer_n, dtype=jnp.int32)
    input_knowledge_point = jax.random.bernoulli(
        k_kp, p=0.5, shape=(B, knowledge_n)).astype(jnp.float32)

    out = ncdm_forward(params, stu_id, input_exercise, input_knowledge_point)
    out = jax.block_until_ready(out)

    # Pure-JAX f32 reference for sanity (kernel uses bf16 matmuls + approx
    # reciprocal sigmoids, so tolerance is loosened accordingly).
    def ref_forward(p, sid, eid, kp):
        stat = jax.nn.sigmoid(p["student_emb"][sid])
        kd = jax.nn.sigmoid(p["k_difficulty"][eid])
        ed = jax.nn.sigmoid(p["e_difficulty"][eid])
        x = ed * (stat - kd) * kp
        x = jax.nn.sigmoid(x @ jnp.abs(p["w1"]).T + p["b1"])
        x = jax.nn.sigmoid(x @ jnp.abs(p["w2"]).T + p["b2"])
        return jax.nn.sigmoid(x @ jnp.abs(p["w3"]).T + p["b3"]).reshape(-1)

    ref = ref_forward(params, stu_id, input_exercise, input_knowledge_point)

    assert out.shape == (B,)
    assert bool(jnp.all(jnp.isfinite(out)))
    assert bool(jnp.allclose(out, ref, atol=2e-2, rtol=2e-2)), (out, ref)
    print("KERNEL_OK")
</pallas_src>

<mosaic_0001>
module attributes {stable_mosaic.version = 11 : i64} {
  func.func @ncdm_kernel(%arg0: i32, %arg1: memref<8x32xbf16, #tpu.memory_space<vmem>>, %arg2: memref<8x32xbf16, #tpu.memory_space<vmem>>, %arg3: memref<8x32xbf16, #tpu.memory_space<vmem>>, %arg4: memref<32x512xbf16, #tpu.memory_space<vmem>>, %arg5: memref<1x512xf32, #tpu.memory_space<vmem>>, %arg6: memref<512x256xbf16, #tpu.memory_space<vmem>>, %arg7: memref<1x256xf32, #tpu.memory_space<vmem>>, %arg8: memref<1x256xf32, #tpu.memory_space<vmem>>, %arg9: memref<1x1xf32, #tpu.memory_space<vmem>>, %arg10: memref<1x1x8xf32, #tpu.memory_space<vmem>>) attributes {dimension_semantics = [#tpu.dimension_semantics<parallel>], iteration_bounds = array<i64: 1>, scalar_prefetch = 0 : i64, scratch_operands = 0 : i64, tpu.core_type = #tpu.core_type<tc>, window_params = [{transform_indices = @transform_0, window_bounds = array<i64: 8, 32>}, {transform_indices = @transform_1, window_bounds = array<i64: 8, 32>}, {transform_indices = @transform_2, window_bounds = array<i64: 8, 32>}, {pipeline_mode = #tpu.pipeline_mode<synchronous>, transform_indices = @transform_3, window_bounds = array<i64: 32, 512>}, {pipeline_mode = #tpu.pipeline_mode<synchronous>, transform_indices = @transform_4, window_bounds = array<i64: 1, 512>}, {pipeline_mode = #tpu.pipeline_mode<synchronous>, transform_indices = @transform_5, window_bounds = array<i64: 512, 256>}, {pipeline_mode = #tpu.pipeline_mode<synchronous>, transform_indices = @transform_6, window_bounds = array<i64: 1, 256>}, {pipeline_mode = #tpu.pipeline_mode<synchronous>, transform_indices = @transform_7, window_bounds = array<i64: 1, 256>}, {pipeline_mode = #tpu.pipeline_mode<synchronous>, transform_indices = @transform_8, window_bounds = array<i64: 1, 1>}, {transform_indices = @transform_9, window_bounds = array<i64: 1, 1, 8>}]} {
    %c0 = arith.constant 0 : index
    %c0_0 = arith.constant 0 : index
    %0 = vector.load %arg1[%c0, %c0_0] : memref<8x32xbf16, #tpu.memory_space<vmem>>, vector<8x32xbf16>
    %1 = arith.extf %0 : vector<8x32xbf16> to vector<8x32xf32>
    %2 = arith.negf %1 : vector<8x32xf32>
    %3 = math.exp %2 : vector<8x32xf32>
    %cst = arith.constant 1.000000e+00 : f32
    %4 = vector.broadcast %cst : f32 to vector<8x32xf32>
    %5 = arith.addf %4, %3 : vector<8x32xf32>
    %6 = arith.divf %4, %5 : vector<8x32xf32>
    %c0_1 = arith.constant 0 : index
    %c0_2 = arith.constant 0 : index
    %7 = vector.load %arg2[%c0_1, %c0_2] : memref<8x32xbf16, #tpu.memory_space<vmem>>, vector<8x32xbf16>
    %8 = arith.extf %7 : vector<8x32xbf16> to vector<8x32xf32>
    %9 = arith.negf %8 : vector<8x32xf32>
    %10 = math.exp %9 : vector<8x32xf32>
    %cst_3 = arith.constant 1.000000e+00 : f32
    %11 = vector.broadcast %cst_3 : f32 to vector<8x32xf32>
    %12 = arith.addf %11, %10 : vector<8x32xf32>
    %13 = arith.divf %11, %12 : vector<8x32xf32>
    %14 = arith.subf %6, %13 : vector<8x32xf32>
    %c0_4 = arith.constant 0 : index
    %c0_5 = arith.constant 0 : index
    %15 = vector.load %arg3[%c0_4, %c0_5] : memref<8x32xbf16, #tpu.memory_space<vmem>>, vector<8x32xbf16>
    %16 = arith.extf %15 : vector<8x32xbf16> to vector<8x32xf32>
    %17 = arith.mulf %14, %16 : vector<8x32xf32>
    %18 = arith.truncf %17 : vector<8x32xf32> to vector<8x32xbf16>
    %c0_6 = arith.constant 0 : index
    %c0_7 = arith.constant 0 : index
    %19 = vector.load %arg4[%c0_6, %c0_7] : memref<32x512xbf16, #tpu.memory_space<vmem>>, vector<32x512xbf16>
    %cst_8 = arith.constant dense<0.000000e+00> : vector<8x512xf32>
    %20 = tpu.matmul %18, %19, %cst_8 {dimension_numbers = #tpu.dot_dimension_numbers<[1], [0], [0], [1], [0, 0, 1, 1], [], []>} : vector<8x32xbf16>, vector<32x512xbf16>, vector<8x512xf32> -> vector<8x512xf32>
    %c0_9 = arith.constant 0 : index
    %c0_10 = arith.constant 0 : index
    %21 = vector.load %arg5[%c0_9, %c0_10] : memref<1x512xf32, #tpu.memory_space<vmem>>, vector<1x512xf32>
    %22 = vector.broadcast %21 : vector<1x512xf32> to vector<8x512xf32>
    %23 = arith.addf %20, %22 : vector<8x512xf32>
    %cst_11 = arith.constant 0.000000e+00 : f32
    %24 = vector.broadcast %cst_11 : f32 to vector<8x512xf32>
    %25 = arith.subf %24, %23 : vector<8x512xf32>
    %26 = math.exp %25 : vector<8x512xf32>
    %cst_12 = arith.constant 1.000000e+00 : f32
    %27 = vector.broadcast %cst_12 : f32 to vector<8x512xf32>
    %28 = arith.addf %27, %26 : vector<8x512xf32>
    %29 = tpu.reciprocal %28 {approx = true} : vector<8x512xf32> -> vector<8x512xf32>
    %30 = arith.truncf %29 : vector<8x512xf32> to vector<8x512xbf16>
    %c0_13 = arith.constant 0 : index
    %c0_14 = arith.constant 0 : index
    %31 = vector.load %arg6[%c0_13, %c0_14] : memref<512x256xbf16, #tpu.memory_space<vmem>>, vector<512x256xbf16>
    %cst_15 = arith.constant dense<0.000000e+00> : vector<8x256xf32>
    %32 = tpu.matmul %30, %31, %cst_15 {dimension_numbers = #tpu.dot_dimension_numbers<[1], [0], [0], [1], [0, 0, 1, 1], [], []>} : vector<8x512xbf16>, vector<512x256xbf16>, vector<8x256xf32> -> vector<8x256xf32>
    %c0_16 = arith.constant 0 : index
    %c0_17 = arith.constant 0 : index
    %33 = vector.load %arg7[%c0_16, %c0_17] : memref<1x256xf32, #tpu.memory_space<vmem>>, vector<1x256xf32>
    %34 = vector.broadcast %33 : vector<1x256xf32> to vector<8x256xf32>
    %35 = arith.addf %32, %34 : vector<8x256xf32>
    %cst_18 = arith.constant 0.000000e+00 : f32
    %36 = vector.broadcast %cst_18 : f32 to vector<8x256xf32>
    %37 = arith.subf %36, %35 : vector<8x256xf32>
    %38 = math.exp %37 : vector<8x256xf32>
    %cst_19 = arith.constant 1.000000e+00 : f32
    %39 = vector.broadcast %cst_19 : f32 to vector<8x256xf32>
    %40 = arith.addf %39, %38 : vector<8x256xf32>
    %41 = tpu.reciprocal %40 {approx = true} : vector<8x256xf32> -> vector<8x256xf32>
    %c0_20 = arith.constant 0 : index
    %c0_21 = arith.constant 0 : index
    %42 = vector.load %arg8[%c0_20, %c0_21] : memref<1x256xf32, #tpu.memory_space<vmem>>, vector<1x256xf32>
    %43 = vector.broadcast %42 : vector<1x256xf32> to vector<8x256xf32>
    %44 = arith.mulf %41, %43 : vector<8x256xf32>
    %cst_22 = arith.constant dense<0.000000e+00> : vector<8xf32>
    %45 = vector.multi_reduction <add>, %44, %cst_22 [1] : vector<8x256xf32> to vector<8xf32>
    %46 = vector.shape_cast %45 : vector<8xf32> to vector<8x1xf32>
    %47 = tpu.transpose %46, [1, 0] : vector<8x1xf32> -> vector<1x8xf32>
    %c0_23 = arith.constant 0 : index
    %c0_24 = arith.constant 0 : index
    %48 = vector.load %arg9[%c0_23, %c0_24] : memref<1x1xf32, #tpu.memory_space<vmem>>, vector<1x1xf32>
    %49 = vector.broadcast %48 : vector<1x1xf32> to vector<1x8xf32>
    %50 = arith.addf %47, %49 : vector<1x8xf32>
    %cst_25 = arith.constant 0.000000e+00 : f32
    %51 = vector.broadcast %cst_25 : f32 to vector<1x8xf32>
    %52 = arith.subf %51, %50 : vector<1x8xf32>
    %53 = math.exp %52 : vector<1x8xf32>
    %cst_26 = arith.constant 1.000000e+00 : f32
    %54 = vector.broadcast %cst_26 : f32 to vector<1x8xf32>
    %55 = arith.addf %54, %53 : vector<1x8xf32>
    %56 = tpu.reciprocal %55 {approx = true} : vector<1x8xf32> -> vector<1x8xf32>
    %57 = vector.shape_cast %56 : vector<1x8xf32> to vector<1x1x8xf32>
    %c0_27 = arith.constant 0 : index
    %c0_28 = arith.constant 0 : index
    %c0_29 = arith.constant 0 : index
    %58 = vector.load %arg10[%c0_27, %c0_28, %c0_29] : memref<1x1x8xf32, #tpu.memory_space<vmem>>, vector<1x1x8xf32>
    tpu.vector_store %arg10[%c0_27, %c0_28, %c0_29], %57 {strides = array<i32>} : memref<1x1x8xf32, #tpu.memory_space<vmem>>, vector<1x1x8xf32>,
    return
  }
  func.func @transform_0(%arg0: i32) -> (i32, i32) {
    %c0_i32 = arith.constant 0 : i32
    %c0_i32_0 = arith.constant 0 : i32
    return %arg0, %c0_i32 : i32, i32
  }
  func.func @transform_1(%arg0: i32) -> (i32, i32) {
    %c0_i32 = arith.constant 0 : i32
    %c0_i32_0 = arith.constant 0 : i32
    return %arg0, %c0_i32 : i32, i32
  }
  func.func @transform_2(%arg0: i32) -> (i32, i32) {
    %c0_i32 = arith.constant 0 : i32
    %c0_i32_0 = arith.constant 0 : i32
    return %arg0, %c0_i32 : i32, i32
  }
  func.func @transform_3(%arg0: i32) -> (i32, i32) {
    %c0_i32 = arith.constant 0 : i32
    %c0_i32_0 = arith.constant 0 : i32
    %c0_i32_1 = arith.constant 0 : i32
    return %c0_i32, %c0_i32_0 : i32, i32
  }
  func.func @transform_4(%arg0: i32) -> (i32, i32) {
    %c0_i32 = arith.constant 0 : i32
    %c0_i32_0 = arith.constant 0 : i32
    %c0_i32_1 = arith.constant 0 : i32
    return %c0_i32, %c0_i32_0 : i32, i32
  }
  func.func @transform_5(%arg0: i32) -> (i32, i32) {
    %c0_i32 = arith.constant 0 : i32
    %c0_i32_0 = arith.constant 0 : i32
    %c0_i32_1 = arith.constant 0 : i32
    return %c0_i32, %c0_i32_0 : i32, i32
  }
  func.func @transform_6(%arg0: i32) -> (i32, i32) {
    %c0_i32 = arith.constant 0 : i32
    %c0_i32_0 = arith.constant 0 : i32
    %c0_i32_1 = arith.constant 0 : i32
    return %c0_i32, %c0_i32_0 : i32, i32
  }
  func.func @transform_7(%arg0: i32) -> (i32, i32) {
    %c0_i32 = arith.constant 0 : i32
    %c0_i32_0 = arith.constant 0 : i32
    %c0_i32_1 = arith.constant 0 : i32
    return %c0_i32, %c0_i32_0 : i32, i32
  }
  func.func @transform_8(%arg0: i32) -> (i32, i32) {
    %c0_i32 = arith.constant 0 : i32
    %c0_i32_0 = arith.constant 0 : i32
    %c0_i32_1 = arith.constant 0 : i32
    return %c0_i32, %c0_i32_0 : i32, i32
  }
  func.func @transform_9(%arg0: i32) -> (i32, i32, i32) {
    %c0_i32 = arith.constant 0 : i32
    %c0_i32_0 = arith.constant 0 : i32
    %c0_i32_1 = arith.constant 0 : i32
    return %arg0, %c0_i32, %c0_i32_0 : i32, i32, i32
  }
}

</mosaic_0001>

<llo_original>
// kernel: tpu_custom_call.1
$region0: #{tpu_custom_call.1}
  #allocation0 [shape = 'u32[]', space=smem, size = 0x4, offset = 0x4, fixed_abs, tag = 'smem constant byte address 0x4 - core index']
  #allocation1 [shape = 'u32[144,128]{1,0:T(1,128)}', space=vmem, size = 0x12000, scoped, tag = 'internal scratch']
  #allocation2 [shape = 'f32[1,1]{1,0:T(1,128)S(1)}', space=vmem, size = 0x200, scoped, tag = 'scoped memory for tpu_custom_call.1']
  %s0 = inlined_call_operand.hbm [shape: bf16[8,32], index: 0, kind: input, shape index: {}]
  %s1 = inlined_call_operand.vmem [shape: bf16[8,32], index: 1, kind: input, shape index: {}]
  %s2 = inlined_call_operand.vmem [shape: bf16[8,32], index: 2, kind: input, shape index: {}]
  %s3 = inlined_call_operand.hbm [shape: bf16[32,512], index: 3, kind: input, shape index: {}]
  %s4 = inlined_call_operand.vmem [shape: f32[1,512], index: 4, kind: input, shape index: {}]
  %s5 = inlined_call_operand.hbm [shape: bf16[512,256], index: 5, kind: input, shape index: {}]
  %s6 = inlined_call_operand.vmem [shape: f32[1,256], index: 6, kind: input, shape index: {}]
  %s7 = inlined_call_operand.vmem [shape: f32[1,256], index: 7, kind: input, shape index: {}]
  %s8 = inlined_call_operand.<no memory space> [shape: f32[1,1], index: 8, kind: input, shape index: {}]
  %s9 = inlined_call_operand.hbm [shape: f32[1,1,8], index: 9, kind: output, shape index: {}]
  %s10 = sld [smem:[#allocation0]]
  $region58: #{tpu_custom_call.1} parent=0
    _
  %s12 = ssub.s32 1, %s10
  %s13 = scalar_select 0, %s12, %s10
  %v14 = vstv %s8
  %15 = vst [vmem:[#allocation2] sm:$0x1] %v14
  $region1: #{tpu_custom_call.1} parent=0
    #allocation3 [shape = 'u8[2048]{0}', space=vmem, size = 0x800, scoped, tag = 'input window, operand 0, single buffered']
    #allocation4 [shape = 's32[1]{0}', space=sflag, size = 0x4, scoped, tag = 'scoped memory for tpu_custom_call.1']
    #allocation5 [shape = 's32[1]{0}', space=sflag, size = 0x4, scoped, tag = 'scoped memory for tpu_custom_call.1']
    #allocation6 [shape = 'u8[32768]{0}', space=vmem, size = 0x8000, scoped, tag = 'input window, operand 3, single buffered']
    #allocation7 [shape = 's32[1]{0}', space=sflag, size = 0x4, scoped, tag = 'scoped memory for tpu_custom_call.1']
    #allocation8 [shape = 'u8[262144]{0}', space=vmem, size = 0x40000, scoped, tag = 'input window, operand 5, single buffered']
    #allocation9 [shape = 'u8[512]{0}', space=vmem, size = 0x400, scoped, tag = 'output window, operand 0, single buffered']
    %16 = vsyncpa [#allocation4], 0
    %17 = vsyncpa [#allocation7], 0
    %18 = vsyncpa [#allocation5], 0
    // Predicated region
    $region2: #{tpu_custom_call.1} parent=1 // pred_check
      _
    $region3: #{tpu_custom_call.1} parent=1 // pred_check_branch
      %20 = sbr.rel (0) target = $region5
    $region4: #{tpu_custom_call.1} parent=1 // pred_region
      %s22 = ssub.s32 64, 64
      %23 = vsyncadd [#allocation4], %s22
      %s25 = sshll.u32 [#allocation3], 4
      %s26 = int_to_ptr.vmem [resolvable:$true] %s25
      %28 = dma.hbm_to_vmem [thread:$0]  %s0, 64, %s26, [#allocation4]
    $region5: #{tpu_custom_call.1} parent=1 // pred_fallthru
      _
    // Predicated region
    $region6: #{tpu_custom_call.1} parent=1 // pred_check
      _
    $region7: #{tpu_custom_call.1} parent=1 // pred_check_branch
      %30 = sbr.rel (0) target = $region9
    $region8: #{tpu_custom_call.1} parent=1 // pred_region
      _
    $region9: #{tpu_custom_call.1} parent=1 // pred_fallthru
      _
    // Predicated region
    $region10: #{tpu_custom_call.1} parent=1 // pred_check
      _
    $region11: #{tpu_custom_call.1} parent=1 // pred_check_branch
      %32 = sbr.rel (0) target = $region13
    $region12: #{tpu_custom_call.1} parent=1 // pred_region
      _
    $region13: #{tpu_custom_call.1} parent=1 // pred_fallthru
      _
    // Predicated region
    $region14: #{tpu_custom_call.1} parent=1 // pred_check
      _
    $region15: #{tpu_custom_call.1} parent=1 // pred_check_branch
      %34 = sbr.rel (0) target = $region17
    $region16: #{tpu_custom_call.1} parent=1 // pred_region
      %s36 = ssub.s32 1024, 1024
      %37 = vsyncadd [#allocation7], %s36
      %s38 = sshll.u32 [#allocation6], 4
      %s39 = int_to_ptr.vmem [resolvable:$true] %s38
      %44 = dma.hbm_to_vmem [thread:$0]  %s3, 1024, %s39, [#allocation7], 256, 256, 16
    $region17: #{tpu_custom_call.1} parent=1 // pred_fallthru
      _
    // Predicated region
    $region18: #{tpu_custom_call.1} parent=1 // pred_check
      _
    $region19: #{tpu_custom_call.1} parent=1 // pred_check_branch
      %46 = sbr.rel (0) target = $region21
    $region20: #{tpu_custom_call.1} parent=1 // pred_region
      _
    $region21: #{tpu_custom_call.1} parent=1 // pred_fallthru
      _
    // Predicated region
    $region22: #{tpu_custom_call.1} parent=1 // pred_check
      _
    $region23: #{tpu_custom_call.1} parent=1 // pred_check_branch
      %48 = sbr.rel (0) target = $region25
    $region24: #{tpu_custom_call.1} parent=1 // pred_region
      %s50 = ssub.s32 8192, 8192
      %51 = vsyncadd [#allocation7], %s50
      %s52 = sshll.u32 [#allocation8], 4
      %s53 = int_to_ptr.vmem [resolvable:$true] %s52
      %58 = dma.hbm_to_vmem [thread:$0]  %s5, 8192, %s53, [#allocation7], 128, 128, 8
    $region25: #{tpu_custom_call.1} parent=1 // pred_fallthru
      _
    // Predicated region
    $region26: #{tpu_custom_call.1} parent=1 // pred_check
      _
    $region27: #{tpu_custom_call.1} parent=1 // pred_check_branch
      %60 = sbr.rel (0) target = $region29
    $region28: #{tpu_custom_call.1} parent=1 // pred_region
      _
    $region29: #{tpu_custom_call.1} parent=1 // pred_fallthru
      _
    // Predicated region
    $region30: #{tpu_custom_call.1} parent=1 // pred_check
      _
    $region31: #{tpu_custom_call.1} parent=1 // pred_check_branch
      %62 = sbr.rel (0) target = $region33
    $region32: #{tpu_custom_call.1} parent=1 // pred_region
      _
    $region33: #{tpu_custom_call.1} parent=1 // pred_fallthru
      _
    // Predicated region
    $region34: #{tpu_custom_call.1} parent=1 // pred_check
      _
    $region35: #{tpu_custom_call.1} parent=1 // pred_check_branch
      %64 = sbr.rel (0) target = $region37
    $region36: #{tpu_custom_call.1} parent=1 // pred_region
      _
    $region37: #{tpu_custom_call.1} parent=1 // pred_fallthru
      _
    // Predicated region
    $region38: #{tpu_custom_call.1} parent=1 // pred_check
      _
    $region39: #{tpu_custom_call.1} parent=1 // pred_check_branch
      %66 = sbr.rel (0) target = $region41
    $region40: #{tpu_custom_call.1} parent=1 // pred_region
      %67 = dma.done [#allocation4], 64
    $region41: #{tpu_custom_call.1} parent=1 // pred_fallthru
      _
    // Predicated region
    $region42: #{tpu_custom_call.1} parent=1 // pred_check
      _
    $region43: #{tpu_custom_call.1} parent=1 // pred_check_branch
      %69 = sbr.rel (0) target = $region45
    $region44: #{tpu_custom_call.1} parent=1 // pred_region
      %70 = dma.done [#allocation7], 1024
    $region45: #{tpu_custom_call.1} parent=1 // pred_fallthru
      _
    // Predicated region
    $region46: #{tpu_custom_call.1} parent=1 // pred_check
      _
    $region47: #{tpu_custom_call.1} parent=1 // pred_check_branch
      %72 = sbr.rel (0) target = $region49
    $region48: #{tpu_custom_call.1} parent=1 // pred_region
      %73 = dma.done [#allocation7], 8192
    $region49: #{tpu_custom_call.1} parent=1 // pred_fallthru
      _
    %v75 = vld [vmem:[#allocation3] sm:$0xf]
    %v76 = vunpack.c.l.bf16 %v75
    %v77 = vxor.u32 %v76, 2147483648
    %v78 = vmul.f32 %v77, 1.442695
    %v79 = vpow.pop %v78
    %v80 = vadd.f32 %v79, 1.0
    %v81 = vrcp.pop %v80
    %v82 = vmul.f32 1.0, %v81
    %v83 = vld [vmem:[%s1] sm:$0xf]
    %v84 = vunpack.c.l.bf16 %v83
    %v85 = vxor.u32 %v84, 2147483648
    %v86 = vmul.f32 %v85, 1.442695
    %v87 = vpow.pop %v86
    %v88 = vadd.f32 %v87, 1.0
    %v89 = vrcp.pop %v88
    %v90 = vmul.f32 1.0, %v89
    %v91 = vsub.f32 %v82, %v90
    %v92 = vld [vmem:[%s2] sm:$0xf]
    %v93 = vunpack.c.l.bf16 %v92
    %v94 = vmul.f32 %v91, %v93
    %v95 = vpack.c.bf16 %v94, %v94
    %v96 = vld [vmem:[#allocation6] sm:$0xff]
    %v97 = vld [vmem:[#allocation6 + $0x8] sm:$0xff]
    %v98 = vld [vmem:[#allocation6 + $0x10] sm:$0xff]
    %v99 = vld [vmem:[#allocation6 + $0x18] sm:$0xff]
    %v100 = vld [vmem:[#allocation6 + $0x20] sm:$0xff]
    %v101 = vld [vmem:[#allocation6 + $0x28] sm:$0xff]
    %v102 = vld [vmem:[#allocation6 + $0x30] sm:$0xff]
    %v103 = vld [vmem:[#allocation6 + $0x38] sm:$0xff]
    %v104 = vld [vmem:[%s4] sm:$0xf]
    %v106 = vlaneseq
    %v107 = vshrl.u32 %v106, 7
    %v108 = vsub.s32 0, %v107
    %v109 = vrot.slane %v104, %v108
    %v110 = vlaneseq
    %v111 = vshrl.u32 %v110, 7
    %v112 = vsub.s32 1, %v111
    %v113 = vrot.slane %v104, %v112
    %v114 = vlaneseq
    %v115 = vshrl.u32 %v114, 7
    %v116 = vsub.s32 2, %v115
    %v117 = vrot.slane %v104, %v116
    %v118 = vlaneseq
    %v119 = vshrl.u32 %v118, 7
    %v120 = vsub.s32 3, %v119
    %v121 = vrot.slane %v104, %v120
    %v134 = vunpack.c.l.b16 %v96
    %v135 = vunpack.c.h.b16 %v96
    %v136 = vunpack.c.l.b16 %v97
    %v137 = vunpack.c.h.b16 %v97
    %v138 = vunpack.c.l.b16 %v98
    %v139 = vunpack.c.h.b16 %v98
    %v140 = vunpack.c.l.b16 %v99
    %v141 = vunpack.c.h.b16 %v99
    %v142 = vunpack.c.l.b16 %v100
    %v143 = vunpack.c.h.b16 %v100
    %v144 = vunpack.c.l.b16 %v101
    %v145 = vunpack.c.h.b16 %v101
    %v146 = vunpack.c.l.b16 %v102
    %v147 = vunpack.c.h.b16 %v102
    %v148 = vunpack.c.l.b16 %v103
    %v149 = vunpack.c.h.b16 %v103
    %v150 = vpack.c.b16 %v138, %v134
    %v151 = vpack.c.b16 %v139, %v135
    %v152 = vpack.c.b16 %v140, %v136
    %v153 = vpack.c.b16 %v141, %v137
    %v154 = vpack.c.b16 %v146, %v142
    %v155 = vpack.c.b16 %v147, %v143
    %v156 = vpack.c.b16 %v148, %v144
    %v157 = vpack.c.b16 %v149, %v145
    %vm166 = vcmask 261120
    %v168 = vsel %vm166, %v95, 0
    %170 = vmatprep.subr.bf16.mxu0 %v151
    %171 = vmatpush1.bf16.msra.mxu0 %v150
    %172 = vmatprep.subr.bf16.mxu0 %v155
    %173 = vmatpush1.bf16.msra.mxu0 %v154
    %174 = vmatprep.subr.bf16.mxu0 0
    %175 = vmatpush1.bf16.msra.mxu0 0
    %176 = vmatprep.subr.bf16.mxu0 0
    %177 = vmatpush1.bf16.msra.mxu0 0
    %178 = vmatprep.subr.bf16.mxu0 0
    %179 = vmatpush1.bf16.msra.mxu0 0
    %180 = vmatprep.subr.bf16.mxu0 0
    %181 = vmatpush1.bf16.msra.mxu0 0
    %182 = vmatprep.subr.bf16.mxu0 0
    %183 = vmatpush1.bf16.msra.mxu0 0
    %184 = vmatprep.subr.bf16.mxu0 0
    %185 = vmatpush1.bf16.msra.mxu0 0
    %186 = vmatprep.subr.bf16.mxu0 0
    %187 = vmatpush1.bf16.msra.mxu0 0
    %188 = vmatprep.subr.bf16.mxu0 0
    %189 = vmatpush1.bf16.msra.mxu0 0
    %190 = vmatprep.subr.bf16.mxu0 0
    %191 = vmatpush1.bf16.msra.mxu0 0
    %192 = vmatprep.subr.bf16.mxu0 0
    %193 = vmatpush1.bf16.msra.mxu0 0
    %194 = vmatprep.subr.bf16.mxu0 0
    %195 = vmatpush1.bf16.msra.mxu0 0
    %196 = vmatprep.subr.bf16.mxu0 0
    %197 = vmatpush1.bf16.msra.mxu0 0
    %198 = vmatprep.subr.bf16.mxu0 0
    %199 = vmatpush1.bf16.msra.mxu0 0
    %200 = vmatprep.subr.bf16.mxu0 0
    %201 = vmatpush1.bf16.msra.mxu0 0
    %202 = vmatprep.mubr.bf16.mxu0 0
    %203 = vmatmul.mubr.bf16.gmra.mrb[0].mxu0 %v168
    %v204 = vpop.f32.mrb[0].mxu0
    %v205 = vadd.f32 %v109, %v204
    %v206 = vpop.f32.mrb[0].mxu0
    %v207 = vadd.f32 %v113, %v206
    %v208 = vpop.f32.mrb[0].mxu0
    %v209 = vpop.f32.mrb[0].mxu0
    %210 = vdwg.mxu0
    %211 = vmatprep.subr.bf16.mxu0 %v153
    %212 = vmatpush1.bf16.msra.mxu0 %v152
    %213 = vmatprep.subr.bf16.mxu0 %v157
    %214 = vmatpush1.bf16.msra.mxu0 %v156
    %215 = vmatprep.subr.bf16.mxu0 0
    %216 = vmatpush1.bf16.msra.mxu0 0
    %217 = vmatprep.subr.bf16.mxu0 0
    %218 = vmatpush1.bf16.msra.mxu0 0
    %219 = vmatprep.subr.bf16.mxu0 0
    %220 = vmatpush1.bf16.msra.mxu0 0
    %221 = vmatprep.subr.bf16.mxu0 0
    %222 = vmatpush1.bf16.msra.mxu0 0
    %223 = vmatprep.subr.bf16.mxu0 0
    %224 = vmatpush1.bf16.msra.mxu0 0
    %225 = vmatprep.subr.bf16.mxu0 0
    %226 = vmatpush1.bf16.msra.mxu0 0
    %227 = vmatprep.subr.bf16.mxu0 0
    %228 = vmatpush1.bf16.msra.mxu0 0
    %229 = vmatprep.subr.bf16.mxu0 0
    %230 = vmatpush1.bf16.msra.mxu0 0
    %231 = vmatprep.subr.bf16.mxu0 0
    %232 = vmatpush1.bf16.msra.mxu0 0
    %233 = vmatprep.subr.bf16.mxu0 0
    %234 = vmatpush1.bf16.msra.mxu0 0
    %235 = vmatprep.subr.bf16.mxu0 0
    %236 = vmatpush1.bf16.msra.mxu0 0
    %237 = vmatprep.subr.bf16.mxu0 0
    %238 = vmatpush1.bf16.msra.mxu0 0
    %239 = vmatprep.subr.bf16.mxu0 0
    %240 = vmatpush1.bf16.msra.mxu0 0
    %241 = vmatprep.subr.bf16.mxu0 0
    %242 = vmatpush1.bf16.msra.mxu0 0
    %243 = vmatprep.mubr.bf16.mxu0 0
    %244 = vmatmul.mubr.bf16.gmra.mrb[0].mxu0 %v168
    %v245 = vpop.f32.mrb[0].mxu0
    %v246 = vadd.f32 %v117, %v245
    %v247 = vpop.f32.mrb[0].mxu0
    %v248 = vadd.f32 %v121, %v247
    %v249 = vpop.f32.mrb[0].mxu0
    %v250 = vpop.f32.mrb[0].mxu0
    %251 = vdwg.mxu0
    %v252 = vsub.f32 0.0, %v205
    %v253 = vsub.f32 0.0, %v207
    %v254 = vsub.f32 0.0, %v246
    %v255 = vsub.f32 0.0, %v248
    %v256 = vmul.f32 %v252, 1.442695
    %v257 = vpow.pop %v256
    %v258 = vmul.f32 %v253, 1.442695
    %v259 = vpow.pop %v258
    %v260 = vmul.f32 %v254, 1.442695
    %v261 = vpow.pop %v260
    %v262 = vmul.f32 %v255, 1.442695
    %v263 = vpow.pop %v262
    %v264 = vadd.f32 %v257, 1.0
    %v265 = vadd.f32 %v259, 1.0
    %v266 = vadd.f32 %v261, 1.0
    %v267 = vadd.f32 %v263, 1.0
    %v268 = vrcp.pop %v264
    %v269 = vrcp.pop %v265
    %v270 = vrcp.pop %v266
    %v271 = vrcp.pop %v267
    %v272 = vpack.c.bf16 %v268, %v268
    %v273 = vpack.c.bf16 %v269, %v269
    %v274 = vpack.c.bf16 %v270, %v270
    %v275 = vpack.c.bf16 %v271, %v271
    %v276 = vld [vmem:[#allocation8] sm:$0xff]
    %v277 = vld [vmem:[#allocation8 + $0x8] sm:$0xff]
    %v278 = vld [vmem:[#allocation8 + $0x10] sm:$0xff]
    %v279 = vld [vmem:[#allocation8 + $0x18] sm:$0xff]
    %v280 = vld [vmem:[#allocation8 + $0x20] sm:$0xff]
    %v281 = vld [vmem:[#allocation8 + $0x28] sm:$0xff]
    %v282 = vld [vmem:[#allocation8 + $0x30] sm:$0xff]
    %v283 = vld [vmem:[#allocation8 + $0x38] sm:$0xff]
    %v284 = vld [vmem:[#allocation8 + $0x40] sm:$0xff]
    %v285 = vld [vmem:[#allocation8 + $0x48] sm:$0xff]
    %v286 = vld [vmem:[#allocation8 + $0x50] sm:$0xff]
    %v287 = vld [vmem:[#allocation8 + $0x58] sm:$0xff]
    %v288 = vld [vmem:[#allocation8 + $0x60] sm:$0xff]
    %v289 = vld [vmem:[#allocation8 + $0x68] sm:$0xff]
    %v290 = vld [vmem:[#allocation8 + $0x70] sm:$0xff]
    %v291 = vld [vmem:[#allocation8 + $0x78] sm:$0xff]
    %v292 = vld [vmem:[#allocation8 + $0x80] sm:$0xff]
    %v293 = vld [vmem:[#allocation8 + $0x88] sm:$0xff]
    %v294 = vld [vmem:[#allocation8 + $0x90] sm:$0xff]
    %v295 = vld [vmem:[#allocation8 + $0x98] sm:$0xff]
    %v296 = vld [vmem:[#allocation8 + $0xa0] sm:$0xff]
    %v297 = vld [vmem:[#allocation8 + $0xa8] sm:$0xff]
    %v298 = vld [vmem:[#allocation8 + $0xb0] sm:$0xff]
    %v299 = vld [vmem:[#allocation8 + $0xb8] sm:$0xff]
    %v300 = vld [vmem:[#allocation8 + $0xc0] sm:$0xff]
    %v301 = vld [vmem:[#allocation8 + $0xc8] sm:$0xff]
    %v302 = vld [vmem:[#allocation8 + $0xd0] sm:$0xff]
    %v303 = vld [vmem:[#allocation8 + $0xd8] sm:$0xff]
    %v304 = vld [vmem:[#allocation8 + $0xe0] sm:$0xff]
    %v305 = vld [vmem:[#allocation8 + $0xe8] sm:$0xff]
    %v306 = vld [vmem:[#allocation8 + $0xf0] sm:$0xff]
    %v307 = vld [vmem:[#allocation8 + $0xf8] sm:$0xff]
    %v308 = vld [vmem:[#allocation8 + $0x100] sm:$0xff]
    %v309 = vld [vmem:[#allocation8 + $0x108] sm:$0xff]
    %v310 = vld [vmem:[#allocation8 + $0x110] sm:$0xff]
    %v311 = vld [vmem:[#allocation8 + $0x118] sm:$0xff]
    %v312 = vld [vmem:[#allocation8 + $0x120] sm:$0xff]
    %v313 = vld [vmem:[#allocation8 + $0x128] sm:$0xff]
    %v314 = vld [vmem:[#allocation8 + $0x130] sm:$0xff]
    %v315 = vld [vmem:[#allocation8 + $0x138] sm:$0xff]
    %v316 = vld [vmem:[#allocation8 + $0x140] sm:$0xff]
    %v317 = vld [vmem:[#allocation8 + $0x148] sm:$0xff]
    %v318 = vld [vmem:[#allocation8 + $0x150] sm:$0xff]
    %v319 = vld [vmem:[#allocation8 + $0x158] sm:$0xff]
    %v320 = vld [vmem:[#allocation8 + $0x160] sm:$0xff]
    %v321 = vld [vmem:[#allocation8 + $0x168] sm:$0xff]
    %v322 = vld [vmem:[#allocation8 + $0x170] sm:$0xff]
    %v323 = vld [vmem:[#allocation8 + $0x178] sm:$0xff]
    %v324 = vld [vmem:[#allocation8 + $0x180] sm:$0xff]
    %v325 = vld [vmem:[#allocation8 + $0x188] sm:$0xff]
    %v326 = vld [vmem:[#allocation8 + $0x190] sm:$0xff]
    %v327 = vld [vmem:[#allocation8 + $0x198] sm:$0xff]
    %v328 = vld [vmem:[#allocation8 + $0x1a0] sm:$0xff]
    %v329 = vld [vmem:[#allocation8 + $0x1a8] sm:$0xff]
    %v330 = vld [vmem:[#allocation8 + $0x1b0] sm:$0xff]
    %v331 = vld [vmem:[#allocation8 + $0x1b8] sm:$0xff]
    %v332 = vld [vmem:[#allocation8 + $0x1c0] sm:$0xff]
    %v333 = vld [vmem:[#allocation8 + $0x1c8] sm:$0xff]
    %v334 = vld [vmem:[#allocation8 + $0x1d0] sm:$0xff]
    %v335 = vld [vmem:[#allocation8 + $0x1d8] sm:$0xff]
    %v336 = vld [vmem:[#allocation8 + $0x1e0] sm:$0xff]
    %v337 = vld [vmem:[#allocation8 + $0x1e8] sm:$0xff]
    %v338 = vld [vmem:[#allocation8 + $0x1f0] sm:$0xff]
    %v339 = vld [vmem:[#allocation8 + $0x1f8] sm:$0xff]
    %v340 = vld [vmem:[%s6] sm:$0x3]
    %v342 = vlaneseq
    %v343 = vshrl.u32 %v342, 7
    %v344 = vsub.s32 0, %v343
    %v345 = vrot.slane %v340, %v344
    %v346 = vlaneseq
    %v347 = vshrl.u32 %v346, 7
    %v348 = vsub.s32 1, %v347
    %v349 = vrot.slane %v340, %v348
    %v416 = vunpack.c.l.b16 %v276
    %v417 = vunpack.c.h.b16 %v276
    %v418 = vunpack.c.l.b16 %v277
    %v419 = vunpack.c.h.b16 %v277
    %v420 = vunpack.c.l.b16 %v278
    %v421 = vunpack.c.h.b16 %v278
    %v422 = vunpack.c.l.b16 %v279
    %v423 = vunpack.c.h.b16 %v279
    %v424 = vunpack.c.l.b16 %v280
    %v425 = vunpack.c.h.b16 %v280
    %v426 = vunpack.c.l.b16 %v281
    %v427 = vunpack.c.h.b16 %v281
    %v428 = vunpack.c.l.b16 %v282
    %v429 = vunpack.c.h.b16 %v282
    %v430 = vunpack.c.l.b16 %v283
    %v431 = vunpack.c.h.b16 %v283
    %v432 = vunpack.c.l.b16 %v284
    %v433 = vunpack.c.h.b16 %v284
    %v434 = vunpack.c.l.b16 %v285
    %v435 = vunpack.c.h.b16 %v285
    %v436 = vunpack.c.l.b16 %v286
    %v437 = vunpack.c.h.b16 %v286
    %v438 = vunpack.c.l.b16 %v287
    %v439 = vunpack.c.h.b16 %v287
    %v440 = vunpack.c.l.b16 %v288
    %v441 = vunpack.c.h.b16 %v288
    %v442 = vunpack.c.l.b16 %v289
    %v443 = vunpack.c.h.b16 %v289
    %v444 = vunpack.c.l.b16 %v290
    %v445 = vunpack.c.h.b16 %v290
    %v446 = vunpack.c.l.b16 %v291
    %v447 = vunpack.c.h.b16 %v291
    %v448 = vunpack.c.l.b16 %v292
    %v449 = vunpack.c.h.b16 %v292
    %v450 = vunpack.c.l.b16 %v293
    %v451 = vunpack.c.h.b16 %v293
    %v452 = vunpack.c.l.b16 %v294
    %v453 = vunpack.c.h.b16 %v294
    %v454 = vunpack.c.l.b16 %v295
    %v455 = vunpack.c.h.b16 %v295
    %v456 = vunpack.c.l.b16 %v296
    %v457 = vunpack.c.h.b16 %v296
    %v458 = vunpack.c.l.b16 %v297
    %v459 = vunpack.c.h.b16 %v297
    %v460 = vunpack.c.l.b16 %v298
    %v461 = vunpack.c.h.b16 %v298
    %v462 = vunpack.c.l.b16 %v299
    %v463 = vunpack.c.h.b16 %v299
    %v464 = vunpack.c.l.b16 %v300
    %v465 = vunpack.c.h.b16 %v300
    %v466 = vunpack.c.l.b16 %v301
    %v467 = vunpack.c.h.b16 %v301
    %v468 = vunpack.c.l.b16 %v302
    %v469 = vunpack.c.h.b16 %v302
    %v470 = vunpack.c.l.b16 %v303
    %v471 = vunpack.c.h.b16 %v303
    %v472 = vunpack.c.l.b16 %v304
    %v473 = vunpack.c.h.b16 %v304
    %v474 = vunpack.c.l.b16 %v305
    %v475 = vunpack.c.h.b16 %v305
    %v476 = vunpack.c.l.b16 %v306
    %v477 = vunpack.c.h.b16 %v306
    %v478 = vunpack.c.l.b16 %v307
    %v479 = vunpack.c.h.b16 %v307
    %v480 = vunpack.c.l.b16 %v308
    %v481 = vunpack.c.h.b16 %v308
    %v482 = vunpack.c.l.b16 %v309
    %v483 = vunpack.c.h.b16 %v309
    %v484 = vunpack.c.l.b16 %v310
    %v485 = vunpack.c.h.b16 %v310
    %v486 = vunpack.c.l.b16 %v311
    %v487 = vunpack.c.h.b16 %v311
    %v488 = vunpack.c.l.b16 %v312
    %v489 = vunpack.c.h.b16 %v312
    %v490 = vunpack.c.l.b16 %v313
    %v491 = vunpack.c.h.b16 %v313
    %v492 = vunpack.c.l.b16 %v314
    %v493 = vunpack.c.h.b16 %v314
    %v494 = vunpack.c.l.b16 %v315
    %v495 = vunpack.c.h.b16 %v315
    %v496 = vunpack.c.l.b16 %v316
    %v497 = vunpack.c.h.b16 %v316
    %v498 = vunpack.c.l.b16 %v317
    %v499 = vunpack.c.h.b16 %v317
    %v500 = vunpack.c.l.b16 %v318
    %v501 = vunpack.c.h.b16 %v318
    %v502 = vunpack.c.l.b16 %v319
    %v503 = vunpack.c.h.b16 %v319
    %v504 = vunpack.c.l.b16 %v320
    %v505 = vunpack.c.h.b16 %v320
    %v506 = vunpack.c.l.b16 %v321
    %v507 = vunpack.c.h.b16 %v321
    %v508 = vunpack.c.l.b16 %v322
    %v509 = vunpack.c.h.b16 %v322
    %v510 = vunpack.c.l.b16 %v323
    %v511 = vunpack.c.h.b16 %v323
    %v512 = vunpack.c.l.b16 %v324
    %v513 = vunpack.c.h.b16 %v324
    %v514 = vunpack.c.l.b16 %v325
    %v515 = vunpack.c.h.b16 %v325
    %v516 = vunpack.c.l.b16 %v326
    %v517 = vunpack.c.h.b16 %v326
    %v518 = vunpack.c.l.b16 %v327
    %v519 = vunpack.c.h.b16 %v327
    %v520 = vunpack.c.l.b16 %v328
    %v521 = vunpack.c.h.b16 %v328
    %v522 = vunpack.c.l.b16 %v329
    %v523 = vunpack.c.h.b16 %v329
    %v524 = vunpack.c.l.b16 %v330
    %v525 = vunpack.c.h.b16 %v330
    %v526 = vunpack.c.l.b16 %v331
    %v527 = vunpack.c.h.b16 %v331
    %v528 = vunpack.c.l.b16 %v332
    %v529 = vunpack.c.h.b16 %v332
    %v530 = vunpack.c.l.b16 %v333
    %v531 = vunpack.c.h.b16 %v333
    %v532 = vunpack.c.l.b16 %v334
    %v533 = vunpack.c.h.b16 %v334
    %v534 = vunpack.c.l.b16 %v335
    %v535 = vunpack.c.h.b16 %v335
    %v536 = vunpack.c.l.b16 %v336
    %v537 = vunpack.c.h.b16 %v336
    %v538 = vunpack.c.l.b16 %v337
    %v539 = vunpack.c.h.b16 %v337
    %v540 = vunpack.c.l.b16 %v338
    %v541 = vunpack.c.h.b16 %v338
    %v542 = vunpack.c.l.b16 %v339
    %v543 = vunpack.c.h.b16 %v339
    %v544 = vpack.c.b16 %v418, %v416
    %v545 = vpack.c.b16 %v419, %v417
    %v546 = vpack.c.b16 %v422, %v420
    %v547 = vpack.c.b16 %v423, %v421
    %v548 = vpack.c.b16 %v426, %v424
    %v549 = vpack.c.b16 %v427, %v425
    %v550 = vpack.c.b16 %v430, %v428
    %v551 = vpack.c.b16 %v431, %v429
    %v552 = vpack.c.b16 %v434, %v432
    %v553 = vpack.c.b16 %v435, %v433
    %v554 = vpack.c.b16 %v438, %v436
    %v555 = vpack.c.b16 %v439, %v437
    %v556 = vpack.c.b16 %v442, %v440
    %v557 = vpack.c.b16 %v443, %v441
    %v558 = vpack.c.b16 %v446, %v444
    %v559 = vpack.c.b16 %v447, %v445
    %v560 = vpack.c.b16 %v450, %v448
    %v561 = vpack.c.b16 %v451, %v449
    %v562 = vpack.c.b16 %v454, %v452
    %v563 = vpack.c.b16 %v455, %v453
    %v564 = vpack.c.b16 %v458, %v456
    %v565 = vpack.c.b16 %v459, %v457
    %v566 = vpack.c.b16 %v462, %v460
    %v567 = vpack.c.b16 %v463, %v461
    %v568 = vpack.c.b16 %v466, %v464
    %v569 = vpack.c.b16 %v467, %v465
    %v570 = vpack.c.b16 %v470, %v468
    %v571 = vpack.c.b16 %v471, %v469
    %v572 = vpack.c.b16 %v474, %v472
    %v573 = vpack.c.b16 %v475, %v473
    %v574 = vpack.c.b16 %v478, %v476
    %v575 = vpack.c.b16 %v479, %v477
    %v576 = vpack.c.b16 %v482, %v480
    %v577 = vpack.c.b16 %v483, %v481
    %v578 = vpack.c.b16 %v486, %v484
    %v579 = vpack.c.b16 %v487, %v485
    %v580 = vpack.c.b16 %v490, %v488
    %v581 = vpack.c.b16 %v491, %v489
    %v582 = vpack.c.b16 %v494, %v492
    %v583 = vpack.c.b16 %v495, %v493
    %v584 = vpack.c.b16 %v498, %v496
    %v585 = vpack.c.b16 %v499, %v497
    %v586 = vpack.c.b16 %v502, %v500
    %v587 = vpack.c.b16 %v503, %v501
    %v588 = vpack.c.b16 %v506, %v504
    %v589 = vpack.c.b16 %v507, %v505
    %v590 = vpack.c.b16 %v510, %v508
    %v591 = vpack.c.b16 %v511, %v509
    %v592 = vpack.c.b16 %v514, %v512
    %v593 = vpack.c.b16 %v515, %v513
    %v594 = vpack.c.b16 %v518, %v516
    %v595 = vpack.c.b16 %v519, %v517
    %v596 = vpack.c.b16 %v522, %v520
    %v597 = vpack.c.b16 %v523, %v521
    %v598 = vpack.c.b16 %v526, %v524
    %v599 = vpack.c.b16 %v527, %v525
    %v600 = vpack.c.b16 %v530, %v528
    %v601 = vpack.c.b16 %v531, %v529
    %v602 = vpack.c.b16 %v534, %v532
    %v603 = vpack.c.b16 %v535, %v533
    %v604 = vpack.c.b16 %v538, %v536
    %v605 = vpack.c.b16 %v539, %v537
    %v606 = vpack.c.b16 %v542, %v540
    %v607 = vpack.c.b16 %v543, %v541
    %672 = vmatprep.subr.bf16.mxu0 %v545
    %673 = vmatpush1.bf16.msra.mxu0 %v544
    %674 = vmatprep.subr.bf16.mxu0 %v547
    %675 = vmatpush1.bf16.msra.mxu0 %v546
    %676 = vmatprep.subr.bf16.mxu0 %v549
    %677 = vmatpush1.bf16.msra.mxu0 %v548
    %678 = vmatprep.subr.bf16.mxu0 %v551
    %679 = vmatpush1.bf16.msra.mxu0 %v550
    %680 = vmatprep.subr.bf16.mxu0 %v553
    %681 = vmatpush1.bf16.msra.mxu0 %v552
    %682 = vmatprep.subr.bf16.mxu0 %v555
    %683 = vmatpush1.bf16.msra.mxu0 %v554
    %684 = vmatprep.subr.bf16.mxu0 %v557
    %685 = vmatpush1.bf16.msra.mxu0 %v556
    %686 = vmatprep.subr.bf16.mxu0 %v559
    %687 = vmatpush1.bf16.msra.mxu0 %v558
    %688 = vmatprep.subr.bf16.mxu0 %v561
    %689 = vmatpush1.bf16.msra.mxu0 %v560
    %690 = vmatprep.subr.bf16.mxu0 %v563
    %691 = vmatpush1.bf16.msra.mxu0 %v562
    %692 = vmatprep.subr.bf16.mxu0 %v565
    %693 = vmatpush1.bf16.msra.mxu0 %v564
    %694 = vmatprep.subr.bf16.mxu0 %v567
    %695 = vmatpush1.bf16.msra.mxu0 %v566
    %696 = vmatprep.subr.bf16.mxu0 %v569
    %697 = vmatpush1.bf16.msra.mxu0 %v568
    %698 = vmatprep.subr.bf16.mxu0 %v571
    %699 = vmatpush1.bf16.msra.mxu0 %v570
    %700 = vmatprep.subr.bf16.mxu0 %v573
    %701 = vmatpush1.bf16.msra.mxu0 %v572
    %702 = vmatprep.subr.bf16.mxu0 %v575
    %703 = vmatpush1.bf16.msra.mxu0 %v574
    %704 = vmatprep.mubr.bf16.mxu0 %v273
    %705 = vmatmul.mubr.bf16.gmra.mrb[0].mxu0 %v272
    %v706 = vpop.f32.mrb[0].mxu0
    %v707 = vadd.f32 %v345, %v706
    %v708 = vpop.f32.mrb[0].mxu0
    %v709 = vadd.f32 %v349, %v708
    %v710 = vpop.f32.mrb[0].mxu0
    %v711 = vpop.f32.mrb[0].mxu0
    %712 = vdwg.mxu0
    %713 = vmatprep.subr.bf16.mxu0 %v577
    %714 = vmatpush1.bf16.msra.mxu0 %v576
    %715 = vmatprep.subr.bf16.mxu0 %v579
    %716 = vmatpush1.bf16.msra.mxu0 %v578
    %717 = vmatprep.subr.bf16.mxu0 %v581
    %718 = vmatpush1.bf16.msra.mxu0 %v580
    %719 = vmatprep.subr.bf16.mxu0 %v583
    %720 = vmatpush1.bf16.msra.mxu0 %v582
    %721 = vmatprep.subr.bf16.mxu0 %v585
    %722 = vmatpush1.bf16.msra.mxu0 %v584
    %723 = vmatprep.subr.bf16.mxu0 %v587
    %724 = vmatpush1.bf16.msra.mxu0 %v586
    %725 = vmatprep.subr.bf16.mxu0 %v589
    %726 = vmatpush1.bf16.msra.mxu0 %v588
    %727 = vmatprep.subr.bf16.mxu0 %v591
    %728 = vmatpush1.bf16.msra.mxu0 %v590
    %729 = vmatprep.subr.bf16.mxu0 %v593
    %730 = vmatpush1.bf16.msra.mxu0 %v592
    %731 = vmatprep.subr.bf16.mxu0 %v595
    %732 = vmatpush1.bf16.msra.mxu0 %v594
    %733 = vmatprep.subr.bf16.mxu0 %v597
    %734 = vmatpush1.bf16.msra.mxu0 %v596
    %735 = vmatprep.subr.bf16.mxu0 %v599
    %736 = vmatpush1.bf16.msra.mxu0 %v598
    %737 = vmatprep.subr.bf16.mxu0 %v601
    %738 = vmatpush1.bf16.msra.mxu0 %v600
    %739 = vmatprep.subr.bf16.mxu0 %v603
    %740 = vmatpush1.bf16.msra.mxu0 %v602
    %741 = vmatprep.subr.bf16.mxu0 %v605
    %742 = vmatpush1.bf16.msra.mxu0 %v604
    %743 = vmatprep.subr.bf16.mxu0 %v607
    %744 = vmatpush1.bf16.msra.mxu0 %v606
    %745 = vmatprep.mubr.bf16.mxu0 %v275
    %746 = vmatmul.mubr.bf16.gmra.mrb[0].mxu0 %v274
    %v747 = vpop.f32.mrb[0].mxu0
    %v748 = vadd.f32 %v707, %v747
    %v749 = vpop.f32.mrb[0].mxu0
    %v750 = vadd.f32 %v709, %v749
    %v751 = vpop.f32.mrb[0].mxu0
    %v752 = vpop.f32.mrb[0].mxu0
    %753 = vdwg.mxu0
    %v754 = vsub.f32 0.0, %v748
    %v755 = vsub.f32 0.0, %v750
    %v756 = vmul.f32 %v754, 1.442695
    %v757 = vpow.pop %v756
    %v758 = vmul.f32 %v755, 1.442695
    %v759 = vpow.pop %v758
    %v760 = vadd.f32 %v757, 1.0
    %v761 = vadd.f32 %v759, 1.0
    %v762 = vrcp.pop %v760
    %v763 = vrcp.pop %v761
    %v764 = vld [vmem:[%s7] sm:$0x3]
    %v766 = vlaneseq
    %v767 = vshrl.u32 %v766, 7
    %v768 = vsub.s32 0, %v767
    %v769 = vrot.slane %v764, %v768
    %v770 = vlaneseq
    %v771 = vshrl.u32 %v770, 7
    %v772 = vsub.s32 1, %v771
    %v773 = vrot.slane %v764, %v772
    %v776 = vmul.f32 %v762, %v769
    %v777 = vmul.f32 %v763, %v773
    %v778 = vadd.f32 %v776, %v777
    %779 = vadd.xlane.f32.xlu0 %v778
    %v780 = vpop.xlane.xlu0 %779
    %781 = vxpose.xlu0.b32.start [1/16] %v780, 128
    %782 = vxpose.xlu0.b32.cont [2/16] 0.0, 128
    %783 = vxpose.xlu0.b32.cont [3/16] 0.0, 128
    %784 = vxpose.xlu0.b32.cont [4/16] 0.0, 128
    %785 = vxpose.xlu0.b32.cont [5/16] 0.0, 128
    %786 = vxpose.xlu0.b32.cont [6/16] 0.0, 128
    %787 = vxpose.xlu0.b32.cont [7/16] 0.0, 128
    %788 = vxpose.xlu0.b32.cont [8/16] 0.0, 128
    %789 = vxpose.xlu0.b32.cont [9/16] 0.0, 128
    %790 = vxpose.xlu0.b32.cont [10/16] 0.0, 128
    %791 = vxpose.xlu0.b32.cont [11/16] 0.0, 128
    %792 = vxpose.xlu0.b32.cont [12/16] 0.0, 128
    %793 = vxpose.xlu0.b32.cont [13/16] 0.0, 128
    %794 = vxpose.xlu0.b32.cont [14/16] 0.0, 128
    %795 = vxpose.xlu0.b32.cont [15/16] 0.0, 128
    %796 = vxpose.xlu0.b32.end [16/16] 0.0, 128
    %v797 = vpop.trf.xlu0
    %v798 = vpop.trf.xlu0
    %v799 = vpop.trf.xlu0
    %v800 = vpop.trf.xlu0
    %v801 = vpop.trf.xlu0
    %v802 = vpop.trf.xlu0
    %v803 = vpop.trf.xlu0
    %v804 = vpop.trf.xlu0
    %v805 = vpop.trf.xlu0
    %v806 = vpop.trf.xlu0
    %v807 = vpop.trf.xlu0
    %v808 = vpop.trf.xlu0
    %v809 = vpop.trf.xlu0
    %v810 = vpop.trf.xlu0
    %v811 = vpop.trf.xlu0
    %v812 = vpop.trf.xlu0
    %v813 = vld [vmem:[#allocation2] sm:$0x1]
    %815 = vset.pattern.permute.xlu0 0
    %816 = vperm.xlu0 %815, %v813
    %v817 = vpop.permute.xlu0 %816
    %v819 = vlaneseq
    %v820 = vshrl.u32 %v819, 7
    %v821 = vsub.s32 0, %v820
    %v822 = vrot.slane %v817, %v821
    %v823 = vadd.f32 %v797, %v822
    %v824 = vsub.f32 0.0, %v823
    %v825 = vmul.f32 %v824, 1.442695
    %v826 = vpow.pop %v825
    %v827 = vadd.f32 %v826, 1.0
    %v828 = vrcp.pop %v827
    %vm829 = vcmask 57344
    %830 = vst.msk [vmem:[#allocation9] sm:$0x1] %vm829, %v828
    // Predicated region
    $region50: #{tpu_custom_call.1} parent=1 // pred_check
      _
    $region51: #{tpu_custom_call.1} parent=1 // pred_check_branch
      %832 = sbr.rel (0) target = $region53
    $region52: #{tpu_custom_call.1} parent=1 // pred_region
      %s834 = ssub.s32 16, 16
      %835 = vsyncadd [#allocation5], %s834
      %s837 = sshll.u32 [#allocation9], 4
      %s838 = int_to_ptr.vmem [resolvable:$true] %s837
      %840 = dma.vmem_to_hbm [thread:$0]  %s838, 16, %s9, [#allocation5]
    $region53: #{tpu_custom_call.1} parent=1 // pred_fallthru
      _
    // Predicated region
    $region54: #{tpu_custom_call.1} parent=1 // pred_check
      _
    $region55: #{tpu_custom_call.1} parent=1 // pred_check_branch
      %842 = sbr.rel (0) target = $region57
    $region56: #{tpu_custom_call.1} parent=1 // pred_region
      %843 = dma.done [#allocation5], 16
    $region57: #{tpu_custom_call.1} parent=1 // pred_fallthru
      _
    %844 = vsyncpa [#allocation4], 1
    %845 = vsyncpa [#allocation7], 1
    %846 = vsyncpa [#allocation5], 1

</llo_original>
